<compile_context>
chip_gen: v7x
topology: tpu7x:2x2x1
jax: 0.10.0
libtpu: 0.0.40
codegen_flags: <defaults>
</compile_context>

<pallas_src>
import jax
import jax.numpy as jnp
from jax.experimental import pallas as pl
from jax.experimental.pallas import tpu as pltpu

_NEG_SLOPE = 0.2
_MASK_BIAS = -1e30


def _round_up(v, m):
    return (v + m - 1) // m * m


def _make_fused_gcn_kernel(layer_dims):
    """Build the fused GAT kernel for statically-known per-layer (Fin, Fout)."""
    n_layers = len(layer_dims)

    def kernel(x_ref, adjb_ref, w_ref, b_ref, o_ref):
        # O(N^2) adjacency bias arrives as bf16 (half the DMA bytes), upcast once
        # and shared by all three layers.
        adj = adjb_ref[...].astype(jnp.float32)            # [N, N]
        bslab = b_ref[...]                                  # [L, width] f32
        h = x_ref[...]                                      # [N, Fin0] f32
        for l, (fin, fout) in enumerate(layer_dims):
            # W_ext = [W | W@att_src | W@att_dst] -> single MXU matmul per layer.
            w_ext = w_ref[l][:fin, :fout + 2]               # [fin, fout+2]
            he = jnp.dot(h, w_ext, preferred_element_type=jnp.float32)  # [N, fout+2]
            hl = he[:, :fout]                               # transformed features
            a_src = he[:, fout:fout + 1]                    # [N, 1]
            a_dst = he[:, fout + 1:fout + 2]                # [N, 1]

            # scores[i, j] = a_dst[i] + a_src[j]  (i = dst/target, j = src/source)
            scores = a_dst + a_src.T                        # [N, N]
            scores = jnp.maximum(scores, _NEG_SLOPE * scores)   # leaky_relu (2 VALU ops)
            scores = scores + adj                           # 0 / -1e30 additive mask

            # Softmax over sources j (self-loops guarantee nonzero denominator).
            m = jnp.max(scores, axis=-1, keepdims=True)
            e = jnp.exp(scores - m)
            denom = jnp.sum(e, axis=-1, keepdims=True)
            attn = e * pl.reciprocal(denom, approx=True)    # EUP, not VALU divide

            bias = bslab[l:l + 1, :fout]                    # [1, fout]
            out = jnp.dot(attn, hl, preferred_element_type=jnp.float32) + bias
            if l < n_layers - 1:
                out = jnp.maximum(out, 0.0)                 # inter-layer ReLU
            h = out
        o_ref[...] = h                                      # only final [N, 1] hits HBM

    return kernel


def make_gcn_forward(layer_dims):
    """conv1 -> relu -> conv2 -> relu -> conv3, fused into one Pallas call."""
    kernel = _make_fused_gcn_kernel(layer_dims)
    vmem = pl.BlockSpec(memory_space=pltpu.MemorySpace.VMEM)

    @jax.jit
    def fwd(x, adj_bias, wslab, bslab):
        n = x.shape[0]
        f_out = layer_dims[-1][1]
        flops = sum(2 * n * (fin * (fout + 2) + n * fout) + 6 * n * n
                    for fin, fout in layer_dims)
        bytes_accessed = (4 * (x.size + wslab.size + bslab.size + n * f_out)
                          + 2 * adj_bias.size)
        # TODO(synk): for many graphs / large N, add a batched + "parallel"
        # dst-row grid axis (2 TCs on v7x), online-softmax over src blocks,
        # lane-dense (>=128-wide) output slab, bf16 matmul operands, and an
        # explicit vmem_limit_bytes on v5e.
        return pl.pallas_call(
            kernel,
            out_shape=jax.ShapeDtypeStruct((n, f_out), jnp.float32),
            in_specs=[vmem, vmem, vmem, vmem],
            out_specs=vmem,
            cost_estimate=pl.CostEstimate(
                flops=flops,
                transcendentals=len(layer_dims) * n * n,
                bytes_accessed=bytes_accessed),
        )(x, adj_bias, wslab, bslab)

    return fwd


def pack_params(params, layer_dims):
    """Fold att vectors into W and pack all layers into two padded slabs.

    wslab[l, :fin, :fout+2] = [W | W@att_src | W@att_dst];  bslab[l, :fout] = bias.
    Only 2 parameter DMAs (plus x and adj_bias) for the whole 3-layer kernel.
    """
    n_layers = len(layer_dims)
    max_fin = _round_up(max(fin for fin, _ in layer_dims), 8)
    width = _round_up(max(fout + 2 for _, fout in layer_dims), 128)
    wslab = jnp.zeros((n_layers, max_fin, width), jnp.float32)
    bslab = jnp.zeros((n_layers, width), jnp.float32)
    for l, (p, (fin, fout)) in enumerate(zip(params, layer_dims)):
        w_ext = jnp.concatenate(
            [p["w"], p["w"] @ p["att_src"], p["w"] @ p["att_dst"]], axis=1)
        wslab = wslab.at[l, :fin, :fout + 2].set(w_ext)
        bslab = bslab.at[l, :fout].set(p["bias"][0])
    return wslab, bslab


def build_adj_bias(edge_index, num_nodes):
    """Additive attention mask [dst, src] in bf16: 0 where an edge (or self-loop)
    exists, -1e30 elsewhere (PyG GATConv add_self_loops=True)."""
    src, dst = edge_index[0], edge_index[1]
    adj = jnp.zeros((num_nodes, num_nodes), jnp.float32)
    adj = adj.at[dst, src].set(1.0)
    diag = jnp.arange(num_nodes)
    adj = adj.at[diag, diag].set(1.0)
    return jnp.where(adj > 0, 0.0, _MASK_BIAS).astype(jnp.bfloat16)


def init_gat_params(key, f_in, f_out):
    k_w, k_s, k_d = jax.random.split(key, 3)
    scale_w = (2.0 / (f_in + f_out)) ** 0.5
    scale_a = (2.0 / (1 + f_out)) ** 0.5
    return {
        "w": (scale_w * jax.random.normal(k_w, (f_in, f_out))).astype(jnp.float32),
        "att_src": (scale_a * jax.random.normal(k_s, (f_out, 1))).astype(jnp.float32),
        "att_dst": (scale_a * jax.random.normal(k_d, (f_out, 1))).astype(jnp.float32),
        "bias": jnp.zeros((1, f_out), jnp.float32),
    }


if __name__ == "__main__":
    key = jax.random.PRNGKey(0)
    k_x, k_e, k_ef, k_p1, k_p2, k_p3 = jax.random.split(key, 6)

    num_predictors = 32   # len(predictors)
    num_nodes = 16
    num_edges = 40

    # Node features [N, F]
    x = jax.random.normal(k_x, (num_nodes, num_predictors), jnp.float32)

    # Random directed edges [2, E]  (row 0 = src, row 1 = dst)
    edge_index = jax.random.randint(k_e, (2, num_edges), 0, num_nodes, jnp.int32)
    adj_bias = build_adj_bias(edge_index, num_nodes)

    # edge_features exist in the data but GATConv(edge_dim=None) ignores them.
    edge_features = jax.random.normal(k_ef, (num_edges, 4), jnp.float32)  # noqa: F841

    # Layer dims: F -> F//2 -> 64 -> 1
    layer_dims = ((num_predictors, num_predictors // 2),
                  (num_predictors // 2, 64),
                  (64, 1))
    params = [
        init_gat_params(k_p1, *layer_dims[0]),
        init_gat_params(k_p2, *layer_dims[1]),
        init_gat_params(k_p3, *layer_dims[2]),
    ]
    wslab, bslab = pack_params(params, layer_dims)

    gcn_forward = make_gcn_forward(layer_dims)
    out = gcn_forward(x, adj_bias, wslab, bslab)
    out = jax.block_until_ready(out)
    assert out.shape == (num_nodes, 1), out.shape
    assert bool(jnp.all(jnp.isfinite(out))), "non-finite output"
    print("KERNEL_OK")
</pallas_src>

<mosaic_0001>
module attributes {stable_mosaic.version = 11 : i64} {
  func.func @kernel(%arg0: memref<16x32xf32, #tpu.memory_space<vmem>>, %arg1: memref<16x16xbf16, #tpu.memory_space<vmem>>, %arg2: memref<3x64x128xf32, #tpu.memory_space<vmem>>, %arg3: memref<3x128xf32, #tpu.memory_space<vmem>>, %arg4: memref<16x1xf32, #tpu.memory_space<vmem>>) attributes {dimension_semantics = [], scalar_prefetch = 0 : i64, scratch_operands = 0 : i64, tpu.core_type = #tpu.core_type<tc>} {
    %c0 = arith.constant 0 : index
    %c0_0 = arith.constant 0 : index
    %0 = vector.load %arg1[%c0, %c0_0] : memref<16x16xbf16, #tpu.memory_space<vmem>>, vector<16x16xbf16>
    %1 = arith.extf %0 : vector<16x16xbf16> to vector<16x16xf32>
    %c0_1 = arith.constant 0 : index
    %c0_2 = arith.constant 0 : index
    %2 = vector.load %arg3[%c0_1, %c0_2] : memref<3x128xf32, #tpu.memory_space<vmem>>, vector<3x128xf32>
    %c0_3 = arith.constant 0 : index
    %c0_4 = arith.constant 0 : index
    %3 = vector.load %arg0[%c0_3, %c0_4] : memref<16x32xf32, #tpu.memory_space<vmem>>, vector<16x32xf32>
    %c0_5 = arith.constant 0 : index
    %c0_6 = arith.constant 0 : index
    %c0_7 = arith.constant 0 : index
    %4 = vector.load %arg2[%c0_5, %c0_6, %c0_7] : memref<3x64x128xf32, #tpu.memory_space<vmem>>, vector<1x64x128xf32>
    %5 = vector.shape_cast %4 : vector<1x64x128xf32> to vector<64x128xf32>
    %6 = vector.extract_strided_slice %5 {offsets = [0, 0], sizes = [32, 18], strides = [1, 1]} : vector<64x128xf32> to vector<32x18xf32>
    %cst = arith.constant dense<0.000000e+00> : vector<16x18xf32>
    %7 = tpu.matmul %3, %6, %cst {dimension_numbers = #tpu.dot_dimension_numbers<[1], [0], [0], [1], [0, 0, 1, 1], [], []>} : vector<16x32xf32>, vector<32x18xf32>, vector<16x18xf32> -> vector<16x18xf32>
    %8 = vector.extract_strided_slice %7 {offsets = [0, 0], sizes = [16, 16], strides = [1, 1]} : vector<16x18xf32> to vector<16x16xf32>
    %9 = vector.extract_strided_slice %7 {offsets = [0, 16], sizes = [16, 1], strides = [1, 1]} : vector<16x18xf32> to vector<16x1xf32>
    %10 = vector.extract_strided_slice %7 {offsets = [0, 17], sizes = [16, 1], strides = [1, 1]} : vector<16x18xf32> to vector<16x1xf32>
    %11 = tpu.transpose %9, [1, 0] : vector<16x1xf32> -> vector<1x16xf32>
    %12 = vector.broadcast %10 : vector<16x1xf32> to vector<16x16xf32>
    %13 = vector.broadcast %11 : vector<1x16xf32> to vector<16x16xf32>
    %14 = arith.addf %12, %13 : vector<16x16xf32>
    %cst_8 = arith.constant 2.000000e-01 : f32
    %15 = vector.broadcast %cst_8 : f32 to vector<16x16xf32>
    %16 = arith.mulf %15, %14 : vector<16x16xf32>
    %17 = arith.maximumf %14, %16 : vector<16x16xf32>
    %18 = arith.addf %17, %1 : vector<16x16xf32>
    %cst_9 = arith.constant dense<0xFF800000> : vector<16xf32>
    %19 = vector.multi_reduction <maximumf>, %18, %cst_9 [1] : vector<16x16xf32> to vector<16xf32>
    %20 = vector.shape_cast %19 : vector<16xf32> to vector<16x1xf32>
    %21 = vector.broadcast %20 : vector<16x1xf32> to vector<16x16xf32>
    %22 = arith.subf %18, %21 : vector<16x16xf32>
    %23 = math.exp %22 : vector<16x16xf32>
    %cst_10 = arith.constant dense<0.000000e+00> : vector<16xf32>
    %24 = vector.multi_reduction <add>, %23, %cst_10 [1] : vector<16x16xf32> to vector<16xf32>
    %25 = vector.shape_cast %24 : vector<16xf32> to vector<16x1xf32>
    %26 = tpu.reciprocal %25 {approx = true} : vector<16x1xf32> -> vector<16x1xf32>
    %27 = vector.broadcast %26 : vector<16x1xf32> to vector<16x16xf32>
    %28 = arith.mulf %23, %27 : vector<16x16xf32>
    %29 = vector.extract_strided_slice %2 {offsets = [0, 0], sizes = [1, 16], strides = [1, 1]} : vector<3x128xf32> to vector<1x16xf32>
    %cst_11 = arith.constant dense<0.000000e+00> : vector<16x16xf32>
    %30 = tpu.matmul %28, %8, %cst_11 {dimension_numbers = #tpu.dot_dimension_numbers<[1], [0], [0], [1], [0, 0, 1, 1], [], []>} : vector<16x16xf32>, vector<16x16xf32>, vector<16x16xf32> -> vector<16x16xf32>
    %31 = vector.broadcast %29 : vector<1x16xf32> to vector<16x16xf32>
    %32 = arith.addf %30, %31 : vector<16x16xf32>
    %cst_12 = arith.constant 0.000000e+00 : f32
    %33 = vector.broadcast %cst_12 : f32 to vector<16x16xf32>
    %34 = arith.maximumf %32, %33 : vector<16x16xf32>
    %c1 = arith.constant 1 : index
    %c0_13 = arith.constant 0 : index
    %c0_14 = arith.constant 0 : index
    %35 = vector.load %arg2[%c1, %c0_13, %c0_14] : memref<3x64x128xf32, #tpu.memory_space<vmem>>, vector<1x64x128xf32>
    %36 = vector.shape_cast %35 : vector<1x64x128xf32> to vector<64x128xf32>
    %37 = vector.extract_strided_slice %36 {offsets = [0, 0], sizes = [16, 66], strides = [1, 1]} : vector<64x128xf32> to vector<16x66xf32>
    %cst_15 = arith.constant dense<0.000000e+00> : vector<16x66xf32>
    %38 = tpu.matmul %34, %37, %cst_15 {dimension_numbers = #tpu.dot_dimension_numbers<[1], [0], [0], [1], [0, 0, 1, 1], [], []>} : vector<16x16xf32>, vector<16x66xf32>, vector<16x66xf32> -> vector<16x66xf32>
    %39 = vector.extract_strided_slice %38 {offsets = [0, 0], sizes = [16, 64], strides = [1, 1]} : vector<16x66xf32> to vector<16x64xf32>
    %40 = vector.extract_strided_slice %38 {offsets = [0, 64], sizes = [16, 1], strides = [1, 1]} : vector<16x66xf32> to vector<16x1xf32>
    %41 = vector.extract_strided_slice %38 {offsets = [0, 65], sizes = [16, 1], strides = [1, 1]} : vector<16x66xf32> to vector<16x1xf32>
    %42 = tpu.transpose %40, [1, 0] : vector<16x1xf32> -> vector<1x16xf32>
    %43 = vector.broadcast %41 : vector<16x1xf32> to vector<16x16xf32>
    %44 = vector.broadcast %42 : vector<1x16xf32> to vector<16x16xf32>
    %45 = arith.addf %43, %44 : vector<16x16xf32>
    %cst_16 = arith.constant 2.000000e-01 : f32
    %46 = vector.broadcast %cst_16 : f32 to vector<16x16xf32>
    %47 = arith.mulf %46, %45 : vector<16x16xf32>
    %48 = arith.maximumf %45, %47 : vector<16x16xf32>
    %49 = arith.addf %48, %1 : vector<16x16xf32>
    %cst_17 = arith.constant dense<0xFF800000> : vector<16xf32>
    %50 = vector.multi_reduction <maximumf>, %49, %cst_17 [1] : vector<16x16xf32> to vector<16xf32>
    %51 = vector.shape_cast %50 : vector<16xf32> to vector<16x1xf32>
    %52 = vector.broadcast %51 : vector<16x1xf32> to vector<16x16xf32>
    %53 = arith.subf %49, %52 : vector<16x16xf32>
    %54 = math.exp %53 : vector<16x16xf32>
    %cst_18 = arith.constant dense<0.000000e+00> : vector<16xf32>
    %55 = vector.multi_reduction <add>, %54, %cst_18 [1] : vector<16x16xf32> to vector<16xf32>
    %56 = vector.shape_cast %55 : vector<16xf32> to vector<16x1xf32>
    %57 = tpu.reciprocal %56 {approx = true} : vector<16x1xf32> -> vector<16x1xf32>
    %58 = vector.broadcast %57 : vector<16x1xf32> to vector<16x16xf32>
    %59 = arith.mulf %54, %58 : vector<16x16xf32>
    %60 = vector.extract_strided_slice %2 {offsets = [1, 0], sizes = [1, 64], strides = [1, 1]} : vector<3x128xf32> to vector<1x64xf32>
    %cst_19 = arith.constant dense<0.000000e+00> : vector<16x64xf32>
    %61 = tpu.matmul %59, %39, %cst_19 {dimension_numbers = #tpu.dot_dimension_numbers<[1], [0], [0], [1], [0, 0, 1, 1], [], []>} : vector<16x16xf32>, vector<16x64xf32>, vector<16x64xf32> -> vector<16x64xf32>
    %62 = vector.broadcast %60 : vector<1x64xf32> to vector<16x64xf32>
    %63 = arith.addf %61, %62 : vector<16x64xf32>
    %cst_20 = arith.constant 0.000000e+00 : f32
    %64 = vector.broadcast %cst_20 : f32 to vector<16x64xf32>
    %65 = arith.maximumf %63, %64 : vector<16x64xf32>
    %c2 = arith.constant 2 : index
    %c0_21 = arith.constant 0 : index
    %c0_22 = arith.constant 0 : index
    %66 = vector.load %arg2[%c2, %c0_21, %c0_22] : memref<3x64x128xf32, #tpu.memory_space<vmem>>, vector<1x64x128xf32>
    %67 = vector.shape_cast %66 : vector<1x64x128xf32> to vector<64x128xf32>
    %68 = vector.extract_strided_slice %67 {offsets = [0, 0], sizes = [64, 3], strides = [1, 1]} : vector<64x128xf32> to vector<64x3xf32>
    %cst_23 = arith.constant dense<0.000000e+00> : vector<16x3xf32>
    %69 = tpu.matmul %65, %68, %cst_23 {dimension_numbers = #tpu.dot_dimension_numbers<[1], [0], [0], [1], [0, 0, 1, 1], [], []>} : vector<16x64xf32>, vector<64x3xf32>, vector<16x3xf32> -> vector<16x3xf32>
    %70 = vector.extract_strided_slice %69 {offsets = [0, 0], sizes = [16, 1], strides = [1, 1]} : vector<16x3xf32> to vector<16x1xf32>
    %71 = vector.extract_strided_slice %69 {offsets = [0, 1], sizes = [16, 1], strides = [1, 1]} : vector<16x3xf32> to vector<16x1xf32>
    %72 = vector.extract_strided_slice %69 {offsets = [0, 2], sizes = [16, 1], strides = [1, 1]} : vector<16x3xf32> to vector<16x1xf32>
    %73 = tpu.transpose %71, [1, 0] : vector<16x1xf32> -> vector<1x16xf32>
    %74 = vector.broadcast %72 : vector<16x1xf32> to vector<16x16xf32>
    %75 = vector.broadcast %73 : vector<1x16xf32> to vector<16x16xf32>
    %76 = arith.addf %74, %75 : vector<16x16xf32>
    %cst_24 = arith.constant 2.000000e-01 : f32
    %77 = vector.broadcast %cst_24 : f32 to vector<16x16xf32>
    %78 = arith.mulf %77, %76 : vector<16x16xf32>
    %79 = arith.maximumf %76, %78 : vector<16x16xf32>
    %80 = arith.addf %79, %1 : vector<16x16xf32>
    %cst_25 = arith.constant dense<0xFF800000> : vector<16xf32>
    %81 = vector.multi_reduction <maximumf>, %80, %cst_25 [1] : vector<16x16xf32> to vector<16xf32>
    %82 = vector.shape_cast %81 : vector<16xf32> to vector<16x1xf32>
    %83 = vector.broadcast %82 : vector<16x1xf32> to vector<16x16xf32>
    %84 = arith.subf %80, %83 : vector<16x16xf32>
    %85 = math.exp %84 : vector<16x16xf32>
    %cst_26 = arith.constant dense<0.000000e+00> : vector<16xf32>
    %86 = vector.multi_reduction <add>, %85, %cst_26 [1] : vector<16x16xf32> to vector<16xf32>
    %87 = vector.shape_cast %86 : vector<16xf32> to vector<16x1xf32>
    %88 = tpu.reciprocal %87 {approx = true} : vector<16x1xf32> -> vector<16x1xf32>
    %89 = vector.broadcast %88 : vector<16x1xf32> to vector<16x16xf32>
    %90 = arith.mulf %85, %89 : vector<16x16xf32>
    %91 = vector.extract_strided_slice %2 {offsets = [2, 0], sizes = [1, 1], strides = [1, 1]} : vector<3x128xf32> to vector<1x1xf32>
    %cst_27 = arith.constant dense<0.000000e+00> : vector<16x1xf32>
    %92 = tpu.matmul %90, %70, %cst_27 {dimension_numbers = #tpu.dot_dimension_numbers<[1], [0], [0], [1], [0, 0, 1, 1], [], []>} : vector<16x16xf32>, vector<16x1xf32>, vector<16x1xf32> -> vector<16x1xf32>
    %93 = vector.broadcast %91 : vector<1x1xf32> to vector<16x1xf32>
    %94 = arith.addf %92, %93 : vector<16x1xf32>
    %c0_28 = arith.constant 0 : index
    %c0_29 = arith.constant 0 : index
    %95 = vector.load %arg4[%c0_28, %c0_29] : memref<16x1xf32, #tpu.memory_space<vmem>>, vector<16x1xf32>
    tpu.vector_store %arg4[%c0_28, %c0_29], %94 {strides = array<i32>} : memref<16x1xf32, #tpu.memory_space<vmem>>, vector<16x1xf32>,
    return
  }
}

</mosaic_0001>

<llo_original>
// kernel: fwd.1
$region0: #{fwd.1}
  #allocation0 [shape = 'u32[]', space=smem, size = 0x4, offset = 0x4, fixed_abs, tag = 'smem constant byte address 0x4 - core index']
  #allocation1 [shape = 'u32[144,128]{1,0:T(1,128)}', space=vmem, size = 0x12000, scoped, tag = 'internal scratch']
  %s0 = inlined_call_operand.hbm [shape: f32[16,32], index: 0, kind: input, shape index: {}]
  %s1 = inlined_call_operand.hbm [shape: bf16[16,16], index: 1, kind: input, shape index: {}]
  %s2 = inlined_call_operand.hbm [shape: f32[3,64,128], index: 2, kind: input, shape index: {}]
  %s3 = inlined_call_operand.vmem [shape: f32[3,128], index: 3, kind: input, shape index: {}]
  %s4 = inlined_call_operand.vmem [shape: f32[16,1], index: 4, kind: output, shape index: {}]
  %s5 = sld [smem:[#allocation0]]
  $region38: #{fwd.1} parent=0
    _
  %s7 = ssub.s32 1, %s5
  %s8 = scalar_select 0, %s7, %s5
  $region1: #{fwd.1} parent=0
    #allocation2 [shape = 'u8[8192]{0}', space=vmem, size = 0x2000, scoped, tag = 'input window, operand 0, single buffered']
    #allocation3 [shape = 's32[1]{0}', space=sflag, size = 0x4, scoped, tag = 'scoped memory for fwd.1']
    #allocation4 [shape = 'u8[4096]{0}', space=vmem, size = 0x1000, scoped, tag = 'input window, operand 1, single buffered']
    #allocation5 [shape = 's32[1]{0}', space=sflag, size = 0x4, scoped, tag = 'scoped memory for fwd.1']
    #allocation6 [shape = 'u8[98304]{0}', space=vmem, size = 0x18000, scoped, tag = 'input window, operand 2, single buffered']
    %9 = vsyncpa [#allocation3], 0
    %10 = vsyncpa [#allocation5], 0
    // Predicated region
    $region2: #{fwd.1} parent=1 // pred_check
      _
    $region3: #{fwd.1} parent=1 // pred_check_branch
      %12 = sbr.rel (0) target = $region5
    $region4: #{fwd.1} parent=1 // pred_region
      %s14 = ssub.s32 256, 256
      %15 = vsyncadd [#allocation3], %s14
      %s16 = sshll.u32 [#allocation2], 4
      %s17 = int_to_ptr.vmem [resolvable:$true] %s16
      %22 = dma.hbm_to_vmem [thread:$0]  %s0, 256, %s17, [#allocation3], 128, 128, 8
    $region5: #{fwd.1} parent=1 // pred_fallthru
      _
    // Predicated region
    $region6: #{fwd.1} parent=1 // pred_check
      _
    $region7: #{fwd.1} parent=1 // pred_check_branch
      %24 = sbr.rel (0) target = $region9
    $region8: #{fwd.1} parent=1 // pred_region
      %s26 = ssub.s32 128, 128
      %27 = vsyncadd [#allocation5], %s26
      %s28 = sshll.u32 [#allocation4], 4
      %s29 = int_to_ptr.vmem [resolvable:$true] %s28
      %34 = dma.hbm_to_vmem [thread:$0]  %s1, 128, %s29, [#allocation5], 64, 64, 4
    $region9: #{fwd.1} parent=1 // pred_fallthru
      _
    // Predicated region
    $region10: #{fwd.1} parent=1 // pred_check
      _
    $region11: #{fwd.1} parent=1 // pred_check_branch
      %36 = sbr.rel (0) target = $region13
    $region12: #{fwd.1} parent=1 // pred_region
      %s38 = ssub.s32 3072, 3072
      %39 = vsyncadd [#allocation5], %s38
      %s40 = sshll.u32 [#allocation6], 4
      %s41 = int_to_ptr.vmem [resolvable:$true] %s40
      %46 = dma.hbm_to_vmem [thread:$0]  %s2, 3072, %s41, [#allocation5], 128, 128, 8
    $region13: #{fwd.1} parent=1 // pred_fallthru
      _
    // Predicated region
    $region14: #{fwd.1} parent=1 // pred_check
      _
    $region15: #{fwd.1} parent=1 // pred_check_branch
      %48 = sbr.rel (0) target = $region17
    $region16: #{fwd.1} parent=1 // pred_region
      _
    $region17: #{fwd.1} parent=1 // pred_fallthru
      _
    // Predicated region
    $region18: #{fwd.1} parent=1 // pred_check
      _
    $region19: #{fwd.1} parent=1 // pred_check_branch
      %50 = sbr.rel (0) target = $region21
    $region20: #{fwd.1} parent=1 // pred_region
      %51 = dma.done [#allocation3], 256
    $region21: #{fwd.1} parent=1 // pred_fallthru
      _
    // Predicated region
    $region22: #{fwd.1} parent=1 // pred_check
      _
    $region23: #{fwd.1} parent=1 // pred_check_branch
      %53 = sbr.rel (0) target = $region25
    $region24: #{fwd.1} parent=1 // pred_region
      %54 = dma.done [#allocation5], 128
    $region25: #{fwd.1} parent=1 // pred_fallthru
      _
    // Predicated region
    $region26: #{fwd.1} parent=1 // pred_check
      _
    $region27: #{fwd.1} parent=1 // pred_check_branch
      %56 = sbr.rel (0) target = $region29
    $region28: #{fwd.1} parent=1 // pred_region
      %57 = dma.done [#allocation5], 3072
    $region29: #{fwd.1} parent=1 // pred_fallthru
      _
    %v58 = vld [vmem:[#allocation4] sm:$0xf]
    %v59 = vld [vmem:[#allocation4 + $0x4] sm:$0xf]
    %v60 = vunpack.c.l.bf16 %v58
    %v61 = vunpack.c.l.bf16 %v59
    %v62 = vld [vmem:[%s3] sm:$0x7]
    %v63 = vld [vmem:[#allocation2] sm:$0xff]
    %v64 = vld [vmem:[#allocation2 + $0x8] sm:$0xff]
    %v65 = vld [vmem:[#allocation6] sm:$0xff]
    %v66 = vld [vmem:[#allocation6 + $0x8] sm:$0xff]
    %v67 = vld [vmem:[#allocation6 + $0x10] sm:$0xff]
    %v68 = vld [vmem:[#allocation6 + $0x18] sm:$0xff]
    %vm69 = vcmask 261120
    %v71 = vsel %vm69, %v63, 0
    %v74 = vsel %vm69, %v64, 0
    %76 = vmatprep.subr.mxu0 0.0
    %77 = vmatpush1.msra.mxu0 %v65
    %78 = vmatprep.subr.mxu0 0.0
    %79 = vmatpush1.msra.mxu0 %v66
    %80 = vmatprep.subr.mxu0 0.0
    %81 = vmatpush1.msra.mxu0 %v67
    %82 = vmatprep.subr.mxu0 0.0
    %83 = vmatpush1.msra.mxu0 %v68
    %84 = vmatprep.subr.mxu0 0.0
    %85 = vmatpush1.msra.mxu0 0.0
    %86 = vmatprep.subr.mxu0 0.0
    %87 = vmatpush1.msra.mxu0 0.0
    %88 = vmatprep.subr.mxu0 0.0
    %89 = vmatpush1.msra.mxu0 0.0
    %90 = vmatprep.subr.mxu0 0.0
    %91 = vmatpush1.msra.mxu0 0.0
    %92 = vmatprep.subr.mxu0 0.0
    %93 = vmatpush1.msra.mxu0 0.0
    %94 = vmatprep.subr.mxu0 0.0
    %95 = vmatpush1.msra.mxu0 0.0
    %96 = vmatprep.subr.mxu0 0.0
    %97 = vmatpush1.msra.mxu0 0.0
    %98 = vmatprep.subr.mxu0 0.0
    %99 = vmatpush1.msra.mxu0 0.0
    %100 = vmatprep.subr.mxu0 0.0
    %101 = vmatpush1.msra.mxu0 0.0
    %102 = vmatprep.subr.mxu0 0.0
    %103 = vmatpush1.msra.mxu0 0.0
    %104 = vmatprep.subr.mxu0 0.0
    %105 = vmatpush1.msra.mxu0 0.0
    %106 = vmatprep.subr.mxu0 0.0
    %107 = vmatpush1.msra.mxu0 0.0
    %108 = vmatprep.subr.mxu0 0.0
    %109 = vmatpush1.msra.mxu0 0.0
    %110 = vmatprep.subr.mxu0 0.0
    %111 = vmatpush1.msra.mxu0 0.0
    %112 = vmatprep.subr.mxu0 0.0
    %113 = vmatpush1.msra.mxu0 0.0
    %114 = vmatprep.subr.mxu0 0.0
    %115 = vmatpush1.msra.mxu0 0.0
    %116 = vmatprep.subr.mxu0 0.0
    %117 = vmatpush1.msra.mxu0 0.0
    %118 = vmatprep.subr.mxu0 0.0
    %119 = vmatpush1.msra.mxu0 0.0
    %120 = vmatprep.subr.mxu0 0.0
    %121 = vmatpush1.msra.mxu0 0.0
    %122 = vmatprep.subr.mxu0 0.0
    %123 = vmatpush1.msra.mxu0 0.0
    %124 = vmatprep.subr.mxu0 0.0
    %125 = vmatpush1.msra.mxu0 0.0
    %126 = vmatprep.subr.mxu0 0.0
    %127 = vmatpush1.msra.mxu0 0.0
    %128 = vmatprep.subr.mxu0 0.0
    %129 = vmatpush1.msra.mxu0 0.0
    %130 = vmatprep.subr.mxu0 0.0
    %131 = vmatpush1.msra.mxu0 0.0
    %132 = vmatprep.subr.mxu0 0.0
    %133 = vmatpush1.msra.mxu0 0.0
    %134 = vmatprep.subr.mxu0 0.0
    %135 = vmatpush1.msra.mxu0 0.0
    %136 = vmatprep.subr.mxu0 0.0
    %137 = vmatpush1.msra.mxu0 0.0
    %138 = vmatprep.subr.mxu0 0.0
    %139 = vmatpush1.msra.mxu0 0.0
    %140 = vmatprep.mubr.f32.mxu0 0.0
    %141 = vmatmul.mubr.f32.gmra.mrb[0].mxu0 %v71
    %v142 = vpop.f32.mrb[0].mxu0
    %v143 = vadd.f32 0.0, %v142
    %v144 = vpop.f32.mrb[0].mxu0
    %145 = vmatprep.mubr.f32.mxu0 0.0
    %146 = vmatmul.mubr.f32.gmra.mrb[0].mxu0 %v74
    %v147 = vpop.f32.mrb[0].mxu0
    %v148 = vadd.f32 0.0, %v147
    %v149 = vpop.f32.mrb[0].mxu0
    %150 = vdwg.mxu0
    %153 = vrot.lane.b32.xlu0 %v143, 112
    %v154 = vpop.permute.xlu0 %153
    %155 = vrot.lane.b32.xlu0 %v148, 112
    %v156 = vpop.permute.xlu0 %155
    %159 = vxpose.xlu0.b32.start [1/16] %v154, 128
    %160 = vxpose.xlu0.b32.cont [2/16] %v156, 128
    %161 = vxpose.xlu0.b32.cont [3/16] 0.0, 128
    %162 = vxpose.xlu0.b32.cont [4/16] 0.0, 128
    %163 = vxpose.xlu0.b32.cont [5/16] 0.0, 128
    %164 = vxpose.xlu0.b32.cont [6/16] 0.0, 128
    %165 = vxpose.xlu0.b32.cont [7/16] 0.0, 128
    %166 = vxpose.xlu0.b32.cont [8/16] 0.0, 128
    %167 = vxpose.xlu0.b32.cont [9/16] 0.0, 128
    %168 = vxpose.xlu0.b32.cont [10/16] 0.0, 128
    %169 = vxpose.xlu0.b32.cont [11/16] 0.0, 128
    %170 = vxpose.xlu0.b32.cont [12/16] 0.0, 128
    %171 = vxpose.xlu0.b32.cont [13/16] 0.0, 128
    %172 = vxpose.xlu0.b32.cont [14/16] 0.0, 128
    %173 = vxpose.xlu0.b32.cont [15/16] 0.0, 128
    %174 = vxpose.xlu0.b32.end [16/16] 0.0, 128
    %v175 = vpop.trf.xlu0
    %v176 = vpop.trf.xlu0
    %v177 = vpop.trf.xlu0
    %v178 = vpop.trf.xlu0
    %v179 = vpop.trf.xlu0
    %v180 = vpop.trf.xlu0
    %v181 = vpop.trf.xlu0
    %v182 = vpop.trf.xlu0
    %v183 = vpop.trf.xlu0
    %v184 = vpop.trf.xlu0
    %v185 = vpop.trf.xlu0
    %v186 = vpop.trf.xlu0
    %v187 = vpop.trf.xlu0
    %v188 = vpop.trf.xlu0
    %v189 = vpop.trf.xlu0
    %v190 = vpop.trf.xlu0
    %191 = vset.pattern.permute.xlu0 17
    %192 = vperm.xlu0 %191, %v143
    %v193 = vpop.permute.xlu0 %192
    %195 = vset.pattern.permute.xlu0 17
    %196 = vperm.xlu0 %195, %v148
    %v197 = vpop.permute.xlu0 %196
    %v199 = vlaneseq
    %v200 = vshrl.u32 %v199, 7
    %v201 = vsub.s32 0, %v200
    %v202 = vrot.slane %v175, %v201
    %v203 = vadd.f32 %v193, %v202
    %v204 = vadd.f32 %v197, %v202
    %v205 = vmul.f32 %v203, 0.2
    %v206 = vmul.f32 %v204, 0.2
    %v207 = vmax.f32 %v203, %v205
    %v208 = vmax.f32 %v204, %v206
    %v209 = vadd.f32 %v207, %v60
    %v210 = vadd.f32 %v208, %v61
    %vm211 = vcmask 130048
    %v212 = vsel %vm211, %v209, -inf
    %213 = vmax.xlane.f32.xlu0 %v212
    %v214 = vpop.xlane.xlu0 %213
    %v215 = vsel %vm211, %v210, -inf
    %216 = vmax.xlane.f32.xlu0 %v215
    %v217 = vpop.xlane.xlu0 %216
    %v218 = vsub.f32 %v209, %v214
    %v219 = vsub.f32 %v210, %v217
    %v220 = vmul.f32 %v218, 1.442695
    %v221 = vpow.pop %v220
    %v222 = vmul.f32 %v219, 1.442695
    %v223 = vpow.pop %v222
    %v224 = vsel %vm211, %v221, 0.0
    %225 = vadd.xlane.f32.xlu0 %v224
    %v226 = vpop.xlane.xlu0 %225
    %v227 = vsel %vm211, %v223, 0.0
    %228 = vadd.xlane.f32.xlu0 %v227
    %v229 = vpop.xlane.xlu0 %228
    %v230 = vrcp.pop %v226
    %v231 = vrcp.pop %v229
    %v232 = vmul.f32 %v221, %v230
    %v233 = vmul.f32 %v223, %v231
    %v234 = vlaneseq
    %v235 = vshrl.u32 %v234, 7
    %v236 = vsub.s32 0, %v235
    %v237 = vrot.slane %v62, %v236
    %v239 = vsel %vm211, %v232, 0
    %v242 = vsel %vm211, %v233, 0
    %244 = vmatprep.subr.mxu0 0.0
    %245 = vmatpush1.msra.mxu0 %v143
    %246 = vmatprep.subr.mxu0 0.0
    %247 = vmatpush1.msra.mxu0 %v148
    %248 = vmatprep.subr.mxu0 0.0
    %249 = vmatpush1.msra.mxu0 0.0
    %250 = vmatprep.subr.mxu0 0.0
    %251 = vmatpush1.msra.mxu0 0.0
    %252 = vmatprep.subr.mxu0 0.0
    %253 = vmatpush1.msra.mxu0 0.0
    %254 = vmatprep.subr.mxu0 0.0
    %255 = vmatpush1.msra.mxu0 0.0
    %256 = vmatprep.subr.mxu0 0.0
    %257 = vmatpush1.msra.mxu0 0.0
    %258 = vmatprep.subr.mxu0 0.0
    %259 = vmatpush1.msra.mxu0 0.0
    %260 = vmatprep.subr.mxu0 0.0
    %261 = vmatpush1.msra.mxu0 0.0
    %262 = vmatprep.subr.mxu0 0.0
    %263 = vmatpush1.msra.mxu0 0.0
    %264 = vmatprep.subr.mxu0 0.0
    %265 = vmatpush1.msra.mxu0 0.0
    %266 = vmatprep.subr.mxu0 0.0
    %267 = vmatpush1.msra.mxu0 0.0
    %268 = vmatprep.subr.mxu0 0.0
    %269 = vmatpush1.msra.mxu0 0.0
    %270 = vmatprep.subr.mxu0 0.0
    %271 = vmatpush1.msra.mxu0 0.0
    %272 = vmatprep.subr.mxu0 0.0
    %273 = vmatpush1.msra.mxu0 0.0
    %274 = vmatprep.subr.mxu0 0.0
    %275 = vmatpush1.msra.mxu0 0.0
    %276 = vmatprep.subr.mxu0 0.0
    %277 = vmatpush1.msra.mxu0 0.0
    %278 = vmatprep.subr.mxu0 0.0
    %279 = vmatpush1.msra.mxu0 0.0
    %280 = vmatprep.subr.mxu0 0.0
    %281 = vmatpush1.msra.mxu0 0.0
    %282 = vmatprep.subr.mxu0 0.0
    %283 = vmatpush1.msra.mxu0 0.0
    %284 = vmatprep.subr.mxu0 0.0
    %285 = vmatpush1.msra.mxu0 0.0
    %286 = vmatprep.subr.mxu0 0.0
    %287 = vmatpush1.msra.mxu0 0.0
    %288 = vmatprep.subr.mxu0 0.0
    %289 = vmatpush1.msra.mxu0 0.0
    %290 = vmatprep.subr.mxu0 0.0
    %291 = vmatpush1.msra.mxu0 0.0
    %292 = vmatprep.subr.mxu0 0.0
    %293 = vmatpush1.msra.mxu0 0.0
    %294 = vmatprep.subr.mxu0 0.0
    %295 = vmatpush1.msra.mxu0 0.0
    %296 = vmatprep.subr.mxu0 0.0
    %297 = vmatpush1.msra.mxu0 0.0
    %298 = vmatprep.subr.mxu0 0.0
    %299 = vmatpush1.msra.mxu0 0.0
    %300 = vmatprep.subr.mxu0 0.0
    %301 = vmatpush1.msra.mxu0 0.0
    %302 = vmatprep.subr.mxu0 0.0
    %303 = vmatpush1.msra.mxu0 0.0
    %304 = vmatprep.subr.mxu0 0.0
    %305 = vmatpush1.msra.mxu0 0.0
    %306 = vmatprep.subr.mxu0 0.0
    %307 = vmatpush1.msra.mxu0 0.0
    %308 = vmatprep.mubr.f32.mxu0 0.0
    %309 = vmatmul.mubr.f32.gmra.mrb[0].mxu0 %v239
    %v310 = vpop.f32.mrb[0].mxu0
    %v311 = vadd.f32 %v237, %v310
    %v312 = vpop.f32.mrb[0].mxu0
    %313 = vmatprep.mubr.f32.mxu0 0.0
    %314 = vmatmul.mubr.f32.gmra.mrb[0].mxu0 %v242
    %v315 = vpop.f32.mrb[0].mxu0
    %v316 = vadd.f32 %v237, %v315
    %v317 = vpop.f32.mrb[0].mxu0
    %318 = vdwg.mxu0
    %v319 = vmax.f32 %v311, 0.0
    %v320 = vmax.f32 %v316, 0.0
    %s321 = scalar_lea.vmem [#allocation6], 64
    %v322 = vld [vmem:[%s321] sm:$0xff]
    %v323 = vld [vmem:[%s321 + $0x8] sm:$0xff]
    %v325 = vsel %vm211, %v319, 0
    %v328 = vsel %vm211, %v320, 0
    %330 = vmatprep.subr.mxu0 0.0
    %331 = vmatpush1.msra.mxu0 %v322
    %332 = vmatprep.subr.mxu0 0.0
    %333 = vmatpush1.msra.mxu0 %v323
    %334 = vmatprep.subr.mxu0 0.0
    %335 = vmatpush1.msra.mxu0 0.0
    %336 = vmatprep.subr.mxu0 0.0
    %337 = vmatpush1.msra.mxu0 0.0
    %338 = vmatprep.subr.mxu0 0.0
    %339 = vmatpush1.msra.mxu0 0.0
    %340 = vmatprep.subr.mxu0 0.0
    %341 = vmatpush1.msra.mxu0 0.0
    %342 = vmatprep.subr.mxu0 0.0
    %343 = vmatpush1.msra.mxu0 0.0
    %344 = vmatprep.subr.mxu0 0.0
    %345 = vmatpush1.msra.mxu0 0.0
    %346 = vmatprep.subr.mxu0 0.0
    %347 = vmatpush1.msra.mxu0 0.0
    %348 = vmatprep.subr.mxu0 0.0
    %349 = vmatpush1.msra.mxu0 0.0
    %350 = vmatprep.subr.mxu0 0.0
    %351 = vmatpush1.msra.mxu0 0.0
    %352 = vmatprep.subr.mxu0 0.0
    %353 = vmatpush1.msra.mxu0 0.0
    %354 = vmatprep.subr.mxu0 0.0
    %355 = vmatpush1.msra.mxu0 0.0
    %356 = vmatprep.subr.mxu0 0.0
    %357 = vmatpush1.msra.mxu0 0.0
    %358 = vmatprep.subr.mxu0 0.0
    %359 = vmatpush1.msra.mxu0 0.0
    %360 = vmatprep.subr.mxu0 0.0
    %361 = vmatpush1.msra.mxu0 0.0
    %362 = vmatprep.subr.mxu0 0.0
    %363 = vmatpush1.msra.mxu0 0.0
    %364 = vmatprep.subr.mxu0 0.0
    %365 = vmatpush1.msra.mxu0 0.0
    %366 = vmatprep.subr.mxu0 0.0
    %367 = vmatpush1.msra.mxu0 0.0
    %368 = vmatprep.subr.mxu0 0.0
    %369 = vmatpush1.msra.mxu0 0.0
    %370 = vmatprep.subr.mxu0 0.0
    %371 = vmatpush1.msra.mxu0 0.0
    %372 = vmatprep.subr.mxu0 0.0
    %373 = vmatpush1.msra.mxu0 0.0
    %374 = vmatprep.subr.mxu0 0.0
    %375 = vmatpush1.msra.mxu0 0.0
    %376 = vmatprep.subr.mxu0 0.0
    %377 = vmatpush1.msra.mxu0 0.0
    %378 = vmatprep.subr.mxu0 0.0
    %379 = vmatpush1.msra.mxu0 0.0
    %380 = vmatprep.subr.mxu0 0.0
    %381 = vmatpush1.msra.mxu0 0.0
    %382 = vmatprep.subr.mxu0 0.0
    %383 = vmatpush1.msra.mxu0 0.0
    %384 = vmatprep.subr.mxu0 0.0
    %385 = vmatpush1.msra.mxu0 0.0
    %386 = vmatprep.subr.mxu0 0.0
    %387 = vmatpush1.msra.mxu0 0.0
    %388 = vmatprep.subr.mxu0 0.0
    %389 = vmatpush1.msra.mxu0 0.0
    %390 = vmatprep.subr.mxu0 0.0
    %391 = vmatpush1.msra.mxu0 0.0
    %392 = vmatprep.subr.mxu0 0.0
    %393 = vmatpush1.msra.mxu0 0.0
    %394 = vmatprep.mubr.f32.mxu0 0.0
    %395 = vmatmul.mubr.f32.gmra.mrb[0].mxu0 %v325
    %v396 = vpop.f32.mrb[0].mxu0
    %v397 = vadd.f32 0.0, %v396
    %v398 = vpop.f32.mrb[0].mxu0
    %399 = vmatprep.mubr.f32.mxu0 0.0
    %400 = vmatmul.mubr.f32.gmra.mrb[0].mxu0 %v328
    %v401 = vpop.f32.mrb[0].mxu0
    %v402 = vadd.f32 0.0, %v401
    %v403 = vpop.f32.mrb[0].mxu0
    %404 = vdwg.mxu0
    %407 = vrot.lane.b32.xlu0 %v397, 64
    %v408 = vpop.permute.xlu0 %407
    %409 = vrot.lane.b32.xlu0 %v402, 64
    %v410 = vpop.permute.xlu0 %409
    %413 = vxpose.xlu0.b32.start [1/16] %v408, 128
    %414 = vxpose.xlu0.b32.cont [2/16] %v410, 128
    %415 = vxpose.xlu0.b32.cont [3/16] 0.0, 128
    %416 = vxpose.xlu0.b32.cont [4/16] 0.0, 128
    %417 = vxpose.xlu0.b32.cont [5/16] 0.0, 128
    %418 = vxpose.xlu0.b32.cont [6/16] 0.0, 128
    %419 = vxpose.xlu0.b32.cont [7/16] 0.0, 128
    %420 = vxpose.xlu0.b32.cont [8/16] 0.0, 128
    %421 = vxpose.xlu0.b32.cont [9/16] 0.0, 128
    %422 = vxpose.xlu0.b32.cont [10/16] 0.0, 128
    %423 = vxpose.xlu0.b32.cont [11/16] 0.0, 128
    %424 = vxpose.xlu0.b32.cont [12/16] 0.0, 128
    %425 = vxpose.xlu0.b32.cont [13/16] 0.0, 128
    %426 = vxpose.xlu0.b32.cont [14/16] 0.0, 128
    %427 = vxpose.xlu0.b32.cont [15/16] 0.0, 128
    %428 = vxpose.xlu0.b32.end [16/16] 0.0, 128
    %v429 = vpop.trf.xlu0
    %v430 = vpop.trf.xlu0
    %v431 = vpop.trf.xlu0
    %v432 = vpop.trf.xlu0
    %v433 = vpop.trf.xlu0
    %v434 = vpop.trf.xlu0
    %v435 = vpop.trf.xlu0
    %v436 = vpop.trf.xlu0
    %v437 = vpop.trf.xlu0
    %v438 = vpop.trf.xlu0
    %v439 = vpop.trf.xlu0
    %v440 = vpop.trf.xlu0
    %v441 = vpop.trf.xlu0
    %v442 = vpop.trf.xlu0
    %v443 = vpop.trf.xlu0
    %v444 = vpop.trf.xlu0
    %445 = vset.pattern.permute.xlu0 65
    %446 = vperm.xlu0 %445, %v397
    %v447 = vpop.permute.xlu0 %446
    %449 = vset.pattern.permute.xlu0 65
    %450 = vperm.xlu0 %449, %v402
    %v451 = vpop.permute.xlu0 %450
    %v453 = vlaneseq
    %v454 = vshrl.u32 %v453, 7
    %v455 = vsub.s32 0, %v454
    %v456 = vrot.slane %v429, %v455
    %v457 = vadd.f32 %v447, %v456
    %v458 = vadd.f32 %v451, %v456
    %v459 = vmul.f32 %v457, 0.2
    %v460 = vmul.f32 %v458, 0.2
    %v461 = vmax.f32 %v457, %v459
    %v462 = vmax.f32 %v458, %v460
    %v463 = vadd.f32 %v461, %v60
    %v464 = vadd.f32 %v462, %v61
    %v465 = vsel %vm211, %v463, -inf
    %466 = vmax.xlane.f32.xlu0 %v465
    %v467 = vpop.xlane.xlu0 %466
    %v468 = vsel %vm211, %v464, -inf
    %469 = vmax.xlane.f32.xlu0 %v468
    %v470 = vpop.xlane.xlu0 %469
    %v471 = vsub.f32 %v463, %v467
    %v472 = vsub.f32 %v464, %v470
    %v473 = vmul.f32 %v471, 1.442695
    %v474 = vpow.pop %v473
    %v475 = vmul.f32 %v472, 1.442695
    %v476 = vpow.pop %v475
    %v477 = vsel %vm211, %v474, 0.0
    %478 = vadd.xlane.f32.xlu0 %v477
    %v479 = vpop.xlane.xlu0 %478
    %v480 = vsel %vm211, %v476, 0.0
    %481 = vadd.xlane.f32.xlu0 %v480
    %v482 = vpop.xlane.xlu0 %481
    %v483 = vrcp.pop %v479
    %v484 = vrcp.pop %v482
    %v485 = vmul.f32 %v474, %v483
    %v486 = vmul.f32 %v476, %v484
    %v487 = vlaneseq
    %v488 = vshrl.u32 %v487, 7
    %v489 = vsub.s32 1, %v488
    %v490 = vrot.slane %v62, %v489
    %v492 = vsel %vm211, %v485, 0
    %v495 = vsel %vm211, %v486, 0
    %497 = vmatprep.subr.mxu0 0.0
    %498 = vmatpush1.msra.mxu0 %v397
    %499 = vmatprep.subr.mxu0 0.0
    %500 = vmatpush1.msra.mxu0 %v402
    %501 = vmatprep.subr.mxu0 0.0
    %502 = vmatpush1.msra.mxu0 0.0
    %503 = vmatprep.subr.mxu0 0.0
    %504 = vmatpush1.msra.mxu0 0.0
    %505 = vmatprep.subr.mxu0 0.0
    %506 = vmatpush1.msra.mxu0 0.0
    %507 = vmatprep.subr.mxu0 0.0
    %508 = vmatpush1.msra.mxu0 0.0
    %509 = vmatprep.subr.mxu0 0.0
    %510 = vmatpush1.msra.mxu0 0.0
    %511 = vmatprep.subr.mxu0 0.0
    %512 = vmatpush1.msra.mxu0 0.0
    %513 = vmatprep.subr.mxu0 0.0
    %514 = vmatpush1.msra.mxu0 0.0
    %515 = vmatprep.subr.mxu0 0.0
    %516 = vmatpush1.msra.mxu0 0.0
    %517 = vmatprep.subr.mxu0 0.0
    %518 = vmatpush1.msra.mxu0 0.0
    %519 = vmatprep.subr.mxu0 0.0
    %520 = vmatpush1.msra.mxu0 0.0
    %521 = vmatprep.subr.mxu0 0.0
    %522 = vmatpush1.msra.mxu0 0.0
    %523 = vmatprep.subr.mxu0 0.0
    %524 = vmatpush1.msra.mxu0 0.0
    %525 = vmatprep.subr.mxu0 0.0
    %526 = vmatpush1.msra.mxu0 0.0
    %527 = vmatprep.subr.mxu0 0.0
    %528 = vmatpush1.msra.mxu0 0.0
    %529 = vmatprep.subr.mxu0 0.0
    %530 = vmatpush1.msra.mxu0 0.0
    %531 = vmatprep.subr.mxu0 0.0
    %532 = vmatpush1.msra.mxu0 0.0
    %533 = vmatprep.subr.mxu0 0.0
    %534 = vmatpush1.msra.mxu0 0.0
    %535 = vmatprep.subr.mxu0 0.0
    %536 = vmatpush1.msra.mxu0 0.0
    %537 = vmatprep.subr.mxu0 0.0
    %538 = vmatpush1.msra.mxu0 0.0
    %539 = vmatprep.subr.mxu0 0.0
    %540 = vmatpush1.msra.mxu0 0.0
    %541 = vmatprep.subr.mxu0 0.0
    %542 = vmatpush1.msra.mxu0 0.0
    %543 = vmatprep.subr.mxu0 0.0
    %544 = vmatpush1.msra.mxu0 0.0
    %545 = vmatprep.subr.mxu0 0.0
    %546 = vmatpush1.msra.mxu0 0.0
    %547 = vmatprep.subr.mxu0 0.0
    %548 = vmatpush1.msra.mxu0 0.0
    %549 = vmatprep.subr.mxu0 0.0
    %550 = vmatpush1.msra.mxu0 0.0
    %551 = vmatprep.subr.mxu0 0.0
    %552 = vmatpush1.msra.mxu0 0.0
    %553 = vmatprep.subr.mxu0 0.0
    %554 = vmatpush1.msra.mxu0 0.0
    %555 = vmatprep.subr.mxu0 0.0
    %556 = vmatpush1.msra.mxu0 0.0
    %557 = vmatprep.subr.mxu0 0.0
    %558 = vmatpush1.msra.mxu0 0.0
    %559 = vmatprep.subr.mxu0 0.0
    %560 = vmatpush1.msra.mxu0 0.0
    %561 = vmatprep.mubr.f32.mxu0 0.0
    %562 = vmatmul.mubr.f32.gmra.mrb[0].mxu0 %v492
    %v563 = vpop.f32.mrb[0].mxu0
    %v564 = vadd.f32 %v490, %v563
    %v565 = vpop.f32.mrb[0].mxu0
    %566 = vmatprep.mubr.f32.mxu0 0.0
    %567 = vmatmul.mubr.f32.gmra.mrb[0].mxu0 %v495
    %v568 = vpop.f32.mrb[0].mxu0
    %v569 = vadd.f32 %v490, %v568
    %v570 = vpop.f32.mrb[0].mxu0
    %571 = vdwg.mxu0
    %v572 = vmax.f32 %v564, 0.0
    %v573 = vmax.f32 %v569, 0.0
    %s574 = scalar_lea.vmem [#allocation6], 128
    %v575 = vld [vmem:[%s574] sm:$0xff]
    %v576 = vld [vmem:[%s574 + $0x8] sm:$0xff]
    %v577 = vld [vmem:[%s574 + $0x10] sm:$0xff]
    %v578 = vld [vmem:[%s574 + $0x18] sm:$0xff]
    %v579 = vld [vmem:[%s574 + $0x20] sm:$0xff]
    %v580 = vld [vmem:[%s574 + $0x28] sm:$0xff]
    %v581 = vld [vmem:[%s574 + $0x30] sm:$0xff]
    %v582 = vld [vmem:[%s574 + $0x38] sm:$0xff]
    %vm583 = vcmask 523264
    %v585 = vsel %vm583, %v572, 0
    %v588 = vsel %vm583, %v573, 0
    %590 = vmatprep.subr.mxu0 0.0
    %591 = vmatpush1.msra.mxu0 %v575
    %592 = vmatprep.subr.mxu0 0.0
    %593 = vmatpush1.msra.mxu0 %v576
    %594 = vmatprep.subr.mxu0 0.0
    %595 = vmatpush1.msra.mxu0 %v577
    %596 = vmatprep.subr.mxu0 0.0
    %597 = vmatpush1.msra.mxu0 %v578
    %598 = vmatprep.subr.mxu0 0.0
    %599 = vmatpush1.msra.mxu0 %v579
    %600 = vmatprep.subr.mxu0 0.0
    %601 = vmatpush1.msra.mxu0 %v580
    %602 = vmatprep.subr.mxu0 0.0
    %603 = vmatpush1.msra.mxu0 %v581
    %604 = vmatprep.subr.mxu0 0.0
    %605 = vmatpush1.msra.mxu0 %v582
    %606 = vmatprep.subr.mxu0 0.0
    %607 = vmatpush1.msra.mxu0 0.0
    %608 = vmatprep.subr.mxu0 0.0
    %609 = vmatpush1.msra.mxu0 0.0
    %610 = vmatprep.subr.mxu0 0.0
    %611 = vmatpush1.msra.mxu0 0.0
    %612 = vmatprep.subr.mxu0 0.0
    %613 = vmatpush1.msra.mxu0 0.0
    %614 = vmatprep.subr.mxu0 0.0
    %615 = vmatpush1.msra.mxu0 0.0
    %616 = vmatprep.subr.mxu0 0.0
    %617 = vmatpush1.msra.mxu0 0.0
    %618 = vmatprep.subr.mxu0 0.0
    %619 = vmatpush1.msra.mxu0 0.0
    %620 = vmatprep.subr.mxu0 0.0
    %621 = vmatpush1.msra.mxu0 0.0
    %622 = vmatprep.subr.mxu0 0.0
    %623 = vmatpush1.msra.mxu0 0.0
    %624 = vmatprep.subr.mxu0 0.0
    %625 = vmatpush1.msra.mxu0 0.0
    %626 = vmatprep.subr.mxu0 0.0
    %627 = vmatpush1.msra.mxu0 0.0
    %628 = vmatprep.subr.mxu0 0.0
    %629 = vmatpush1.msra.mxu0 0.0
    %630 = vmatprep.subr.mxu0 0.0
    %631 = vmatpush1.msra.mxu0 0.0
    %632 = vmatprep.subr.mxu0 0.0
    %633 = vmatpush1.msra.mxu0 0.0
    %634 = vmatprep.subr.mxu0 0.0
    %635 = vmatpush1.msra.mxu0 0.0
    %636 = vmatprep.subr.mxu0 0.0
    %637 = vmatpush1.msra.mxu0 0.0
    %638 = vmatprep.subr.mxu0 0.0
    %639 = vmatpush1.msra.mxu0 0.0
    %640 = vmatprep.subr.mxu0 0.0
    %641 = vmatpush1.msra.mxu0 0.0
    %642 = vmatprep.subr.mxu0 0.0
    %643 = vmatpush1.msra.mxu0 0.0
    %644 = vmatprep.subr.mxu0 0.0
    %645 = vmatpush1.msra.mxu0 0.0
    %646 = vmatprep.subr.mxu0 0.0
    %647 = vmatpush1.msra.mxu0 0.0
    %648 = vmatprep.subr.mxu0 0.0
    %649 = vmatpush1.msra.mxu0 0.0
    %650 = vmatprep.subr.mxu0 0.0
    %651 = vmatpush1.msra.mxu0 0.0
    %652 = vmatprep.subr.mxu0 0.0
    %653 = vmatpush1.msra.mxu0 0.0
    %654 = vmatprep.mubr.f32.mxu0 0.0
    %655 = vmatmul.mubr.f32.gmra.mrb[0].mxu0 %v585
    %v656 = vpop.f32.mrb[0].mxu0
    %v657 = vadd.f32 0.0, %v656
    %v658 = vpop.f32.mrb[0].mxu0
    %659 = vmatprep.mubr.f32.mxu0 0.0
    %660 = vmatmul.mubr.f32.gmra.mrb[0].mxu0 %v588
    %v661 = vpop.f32.mrb[0].mxu0
    %v662 = vadd.f32 0.0, %v661
    %v663 = vpop.f32.mrb[0].mxu0
    %664 = vdwg.mxu0
    %667 = vrot.lane.b32.xlu0 %v657, 127
    %v668 = vpop.permute.xlu0 %667
    %669 = vrot.lane.b32.xlu0 %v662, 127
    %v670 = vpop.permute.xlu0 %669
    %673 = vxpose.xlu0.b32.start [1/16] %v668, 128
    %674 = vxpose.xlu0.b32.cont [2/16] %v670, 128
    %675 = vxpose.xlu0.b32.cont [3/16] 0.0, 128
    %676 = vxpose.xlu0.b32.cont [4/16] 0.0, 128
    %677 = vxpose.xlu0.b32.cont [5/16] 0.0, 128
    %678 = vxpose.xlu0.b32.cont [6/16] 0.0, 128
    %679 = vxpose.xlu0.b32.cont [7/16] 0.0, 128
    %680 = vxpose.xlu0.b32.cont [8/16] 0.0, 128
    %681 = vxpose.xlu0.b32.cont [9/16] 0.0, 128
    %682 = vxpose.xlu0.b32.cont [10/16] 0.0, 128
    %683 = vxpose.xlu0.b32.cont [11/16] 0.0, 128
    %684 = vxpose.xlu0.b32.cont [12/16] 0.0, 128
    %685 = vxpose.xlu0.b32.cont [13/16] 0.0, 128
    %686 = vxpose.xlu0.b32.cont [14/16] 0.0, 128
    %687 = vxpose.xlu0.b32.cont [15/16] 0.0, 128
    %688 = vxpose.xlu0.b32.end [16/16] 0.0, 128
    %v689 = vpop.trf.xlu0
    %v690 = vpop.trf.xlu0
    %v691 = vpop.trf.xlu0
    %v692 = vpop.trf.xlu0
    %v693 = vpop.trf.xlu0
    %v694 = vpop.trf.xlu0
    %v695 = vpop.trf.xlu0
    %v696 = vpop.trf.xlu0
    %v697 = vpop.trf.xlu0
    %v698 = vpop.trf.xlu0
    %v699 = vpop.trf.xlu0
    %v700 = vpop.trf.xlu0
    %v701 = vpop.trf.xlu0
    %v702 = vpop.trf.xlu0
    %v703 = vpop.trf.xlu0
    %v704 = vpop.trf.xlu0
    %705 = vset.pattern.permute.xlu0 2
    %706 = vperm.xlu0 %705, %v657
    %v707 = vpop.permute.xlu0 %706
    %709 = vset.pattern.permute.xlu0 2
    %710 = vperm.xlu0 %709, %v662
    %v711 = vpop.permute.xlu0 %710
    %v713 = vlaneseq
    %v714 = vshrl.u32 %v713, 7
    %v715 = vsub.s32 0, %v714
    %v716 = vrot.slane %v689, %v715
    %v717 = vadd.f32 %v707, %v716
    %v718 = vadd.f32 %v711, %v716
    %v719 = vmul.f32 %v717, 0.2
    %v720 = vmul.f32 %v718, 0.2
    %v721 = vmax.f32 %v717, %v719
    %v722 = vmax.f32 %v718, %v720
    %v723 = vadd.f32 %v721, %v60
    %v724 = vadd.f32 %v722, %v61
    %v725 = vsel %vm211, %v723, -inf
    %726 = vmax.xlane.f32.xlu0 %v725
    %v727 = vpop.xlane.xlu0 %726
    %v728 = vsel %vm211, %v724, -inf
    %729 = vmax.xlane.f32.xlu0 %v728
    %v730 = vpop.xlane.xlu0 %729
    %v731 = vsub.f32 %v723, %v727
    %v732 = vsub.f32 %v724, %v730
    %v733 = vmul.f32 %v731, 1.442695
    %v734 = vpow.pop %v733
    %v735 = vmul.f32 %v732, 1.442695
    %v736 = vpow.pop %v735
    %v737 = vsel %vm211, %v734, 0.0
    %738 = vadd.xlane.f32.xlu0 %v737
    %v739 = vpop.xlane.xlu0 %738
    %v740 = vsel %vm211, %v736, 0.0
    %741 = vadd.xlane.f32.xlu0 %v740
    %v742 = vpop.xlane.xlu0 %741
    %v743 = vrcp.pop %v739
    %v744 = vrcp.pop %v742
    %v745 = vmul.f32 %v734, %v743
    %v746 = vmul.f32 %v736, %v744
    %v747 = vlaneseq
    %v748 = vshrl.u32 %v747, 7
    %v749 = vsub.s32 2, %v748
    %v750 = vrot.slane %v62, %v749
    %v752 = vsel %vm211, %v745, 0
    %v755 = vsel %vm211, %v746, 0
    %757 = vmatprep.subr.mxu0 0.0
    %758 = vmatpush1.msra.mxu0 %v657
    %759 = vmatprep.subr.mxu0 0.0
    %760 = vmatpush1.msra.mxu0 %v662
    %761 = vmatprep.subr.mxu0 0.0
    %762 = vmatpush1.msra.mxu0 0.0
    %763 = vmatprep.subr.mxu0 0.0
    %764 = vmatpush1.msra.mxu0 0.0
    %765 = vmatprep.subr.mxu0 0.0
    %766 = vmatpush1.msra.mxu0 0.0
    %767 = vmatprep.subr.mxu0 0.0
    %768 = vmatpush1.msra.mxu0 0.0
    %769 = vmatprep.subr.mxu0 0.0
    %770 = vmatpush1.msra.mxu0 0.0
    %771 = vmatprep.subr.mxu0 0.0
    %772 = vmatpush1.msra.mxu0 0.0
    %773 = vmatprep.subr.mxu0 0.0
    %774 = vmatpush1.msra.mxu0 0.0
    %775 = vmatprep.subr.mxu0 0.0
    %776 = vmatpush1.msra.mxu0 0.0
    %777 = vmatprep.subr.mxu0 0.0
    %778 = vmatpush1.msra.mxu0 0.0
    %779 = vmatprep.subr.mxu0 0.0
    %780 = vmatpush1.msra.mxu0 0.0
    %781 = vmatprep.subr.mxu0 0.0
    %782 = vmatpush1.msra.mxu0 0.0
    %783 = vmatprep.subr.mxu0 0.0
    %784 = vmatpush1.msra.mxu0 0.0
    %785 = vmatprep.subr.mxu0 0.0
    %786 = vmatpush1.msra.mxu0 0.0
    %787 = vmatprep.subr.mxu0 0.0
    %788 = vmatpush1.msra.mxu0 0.0
    %789 = vmatprep.subr.mxu0 0.0
    %790 = vmatpush1.msra.mxu0 0.0
    %791 = vmatprep.subr.mxu0 0.0
    %792 = vmatpush1.msra.mxu0 0.0
    %793 = vmatprep.subr.mxu0 0.0
    %794 = vmatpush1.msra.mxu0 0.0
    %795 = vmatprep.subr.mxu0 0.0
    %796 = vmatpush1.msra.mxu0 0.0
    %797 = vmatprep.subr.mxu0 0.0
    %798 = vmatpush1.msra.mxu0 0.0
    %799 = vmatprep.subr.mxu0 0.0
    %800 = vmatpush1.msra.mxu0 0.0
    %801 = vmatprep.subr.mxu0 0.0
    %802 = vmatpush1.msra.mxu0 0.0
    %803 = vmatprep.subr.mxu0 0.0
    %804 = vmatpush1.msra.mxu0 0.0
    %805 = vmatprep.subr.mxu0 0.0
    %806 = vmatpush1.msra.mxu0 0.0
    %807 = vmatprep.subr.mxu0 0.0
    %808 = vmatpush1.msra.mxu0 0.0
    %809 = vmatprep.subr.mxu0 0.0
    %810 = vmatpush1.msra.mxu0 0.0
    %811 = vmatprep.subr.mxu0 0.0
    %812 = vmatpush1.msra.mxu0 0.0
    %813 = vmatprep.subr.mxu0 0.0
    %814 = vmatpush1.msra.mxu0 0.0
    %815 = vmatprep.subr.mxu0 0.0
    %816 = vmatpush1.msra.mxu0 0.0
    %817 = vmatprep.subr.mxu0 0.0
    %818 = vmatpush1.msra.mxu0 0.0
    %819 = vmatprep.subr.mxu0 0.0
    %820 = vmatpush1.msra.mxu0 0.0
    %821 = vmatprep.mubr.f32.mxu0 0.0
    %822 = vmatmul.mubr.f32.gmra.mrb[0].mxu0 %v752
    %v823 = vpop.f32.mrb[0].mxu0
    %v824 = vadd.f32 %v750, %v823
    %v825 = vpop.f32.mrb[0].mxu0
    %826 = vmatprep.mubr.f32.mxu0 0.0
    %827 = vmatmul.mubr.f32.gmra.mrb[0].mxu0 %v755
    %v828 = vpop.f32.mrb[0].mxu0
    %v829 = vadd.f32 %v750, %v828
    %v830 = vpop.f32.mrb[0].mxu0
    %831 = vdwg.mxu0
    %vm832 = vcmask 7168
    %833 = vst.msk [vmem:[%s4] sm:$0xff] %vm832, %v824
    %834 = vst.msk [vmem:[%s4 + $0x8] sm:$0xff] %vm832, %v829
    // Predicated region
    $region30: #{fwd.1} parent=1 // pred_check
      _
    $region31: #{fwd.1} parent=1 // pred_check_branch
      %836 = sbr.rel (0) target = $region33
    $region32: #{fwd.1} parent=1 // pred_region
      _
    $region33: #{fwd.1} parent=1 // pred_fallthru
      _
    // Predicated region
    $region34: #{fwd.1} parent=1 // pred_check
      _
    $region35: #{fwd.1} parent=1 // pred_check_branch
      %838 = sbr.rel (0) target = $region37
    $region36: #{fwd.1} parent=1 // pred_region
      _
    $region37: #{fwd.1} parent=1 // pred_fallthru
      _
    %839 = vsyncpa [#allocation3], 1
    %840 = vsyncpa [#allocation5], 1

</llo_original>
